<compile_context>
chip_gen: v7x
topology: tpu7x:2x2x1
jax: 0.10.0
libtpu: 0.0.40
codegen_flags: <defaults>
</compile_context>

<pallas_src>
import jax
import jax.numpy as jnp
from jax.experimental import pallas as pl
from jax.experimental.pallas import tpu as pltpu


def _round_up(x, m):
    return ((x + m - 1) // m) * m


def _td3_critic_kernel(s_ref, a_ref, w1_ref, b1_ref, wq_ref, bq_ref, q_ref):
    # Fused first layer for both heads (concat-free in HBM):
    #   h = relu([s | a] @ [W1 | W4] + [b1 | b4])      -> (TB, 2H), f32 accum
    # The s|a concat happens on loaded VMEM values (cheap lane shift) so a
    # single K=D matmul feeds the MXU; the compute-dtype cast also happens
    # here (VPU work hidden under the MXU pushes) instead of in the wrapper.
    xu = jnp.concatenate([s_ref[...], a_ref[...]], axis=1).astype(w1_ref.dtype)
    h = jnp.dot(xu, w1_ref[...], preferred_element_type=jnp.float32)
    h = jnp.maximum(h + b1_ref[...], 0.0)            # bias + ReLU in f32 (v5e-safe)

    # Fused second layer: block-diagonal (2H, 2) weight -> lane-packed (TB, 2)
    # output [q1 | q2], written with a single store.
    q = jnp.dot(h.astype(wq_ref.dtype), wq_ref[...],
                preferred_element_type=jnp.float32)
    q_ref[...] = (q + bq_ref[...]).astype(q_ref.dtype)


def init_td3_critic_params(key, state_dim, action_dim, hidden_size):
    """PyTorch-style init: U(-1/sqrt(fan_in), 1/sqrt(fan_in)).
    Weights stored pre-transposed as (in_features, out_features)."""
    d = state_dim + action_dim

    def linear(k, fan_in, fan_out):
        kw, kb = jax.random.split(k)
        bound = 1.0 / jnp.sqrt(float(fan_in))
        w = jax.random.uniform(kw, (fan_in, fan_out), jnp.float32, -bound, bound)
        b = jax.random.uniform(kb, (1, fan_out), jnp.float32, -bound, bound)
        return w, b

    k1, k2, k4, k5 = jax.random.split(key, 4)
    w1, b1 = linear(k1, d, hidden_size)
    w2, b2 = linear(k2, hidden_size, 1)
    w4, b4 = linear(k4, d, hidden_size)
    w5, b5 = linear(k5, hidden_size, 1)
    return dict(w1=w1, b1=b1, w2=w2, b2=b2, w4=w4, b4=b4, w5=w5, b5=b5)


def pack_td3_critic_params(params, dtype=jnp.float32):
    """Pack per-head params into the fused kernel layout.

    dtype controls the matmul-operand dtype (jnp.bfloat16 recommended on
    v6e/v7x for HBM bandwidth; the MXU has no useful int/fp8 path for these
    K=D / N=2H operands). Biases stay f32: the bias/ReLU/accumulate epilogue
    is always f32.
    """
    hidden = params["w1"].shape[1]
    w1 = jnp.concatenate([params["w1"], params["w4"]], axis=1)    # (D, 2H)
    b1 = jnp.concatenate([params["b1"], params["b4"]], axis=1)    # (1, 2H)

    # Block-diagonal second layer: col 0 <- W2 on rows [0,H), col 1 <- W5 on [H,2H).
    wq = jnp.zeros((2 * hidden, 2), jnp.float32)
    wq = wq.at[:hidden, 0:1].set(params["w2"])
    wq = wq.at[hidden:, 1:2].set(params["w5"])
    bq = jnp.concatenate([params["b2"], params["b5"]], axis=1)    # (1, 2)

    return dict(
        w1=w1.astype(dtype),
        b1=b1.astype(jnp.float32),
        wq=wq.astype(dtype),
        bq=bq.astype(jnp.float32),
    )


def _choose_batch_tile(B, block_b):
    """Batch tile: <= block_b, multiple of 8 (sublane) when tiling; for large
    batches keep >=2 grid steps so the 'parallel' axis can shard across both
    v7x TensorCores. A single full-batch block (tb == B) is always legal."""
    tb = _round_up(min(block_b, B), 8)
    if B >= 1024:  # large batch: guarantee >=2 grid steps (v7x megacore)
        tb = min(tb, _round_up(pl.cdiv(B, 2), 8))
    if tb >= B:
        tb = B     # block == full array dim (legal even if B % 8 != 0)
    return tb


def td3_critic_forward(inputs, actions, packed, *, block_b=2048):
    """inputs: (B, state_dim), actions: (B, action_dim). Returns (q1, q2), each (B, 1)."""
    B, state_dim = inputs.shape
    action_dim = actions.shape[1]
    d = state_dim + action_dim
    two_h = packed["w1"].shape[1]

    tb = _choose_batch_tile(B, block_b)
    grid = (pl.cdiv(B, tb),)

    # Advisory cost estimate so XLA schedules/overlaps this small kernel
    # sensibly with surrounding ops.
    flops = 2 * B * d * two_h + 2 * B * two_h * 2
    bytes_accessed = int(
        inputs.size * inputs.dtype.itemsize
        + actions.size * actions.dtype.itemsize
        + packed["w1"].size * packed["w1"].dtype.itemsize
        + packed["b1"].size * packed["b1"].dtype.itemsize
        + packed["wq"].size * packed["wq"].dtype.itemsize
        + packed["bq"].size * packed["bq"].dtype.itemsize
        + B * 2 * 4
    )

    q = pl.pallas_call(
        _td3_critic_kernel,
        out_shape=jax.ShapeDtypeStruct((B, 2), jnp.float32),
        grid_spec=pltpu.PrefetchScalarGridSpec(
            num_scalar_prefetch=0,
            grid=grid,
            in_specs=[
                pl.BlockSpec((tb, state_dim), lambda i: (i, 0)),    # states (tiled)
                pl.BlockSpec((tb, action_dim), lambda i: (i, 0)),   # actions (tiled)
                pl.BlockSpec((d, two_h), lambda i: (0, 0)),         # W1 fused (resident)
                pl.BlockSpec((1, two_h), lambda i: (0, 0)),         # b1 fused (resident)
                pl.BlockSpec((two_h, 2), lambda i: (0, 0)),         # Wq block-diag (resident)
                pl.BlockSpec((1, 2), lambda i: (0, 0)),             # bq (resident)
            ],
            out_specs=pl.BlockSpec((tb, 2), lambda i: (i, 0)),
        ),
        compiler_params=pltpu.CompilerParams(
            dimension_semantics=("parallel",)),
        cost_estimate=pl.CostEstimate(
            flops=flops, transcendentals=0, bytes_accessed=bytes_accessed),
    )(inputs, actions, packed["w1"], packed["b1"], packed["wq"], packed["bq"])

    # NOTE: the ragged tail rows (when B % tb != 0) read arbitrary data but
    # every row is computed independently and out-of-range writes are masked,
    # so no wrapper-side pad is needed.  Do not add any cross-row reduction
    # inside the kernel without re-introducing explicit padding/masking.
    return q[:, 0:1], q[:, 1:2]


def td3_critic_reference(inputs, actions, params):
    """Pure-JAX reference matching the PyTorch forward."""
    xu = jnp.concatenate([inputs, actions], axis=1)
    h1 = jnp.maximum(xu @ params["w1"] + params["b1"], 0.0)
    q1 = h1 @ params["w2"] + params["b2"]
    h2 = jnp.maximum(xu @ params["w4"] + params["b4"], 0.0)
    q2 = h2 @ params["w5"] + params["b5"]
    return q1, q2


if __name__ == "__main__":
    key = jax.random.PRNGKey(0)
    k_params, k_state, k_action = jax.random.split(key, 3)

    batch = 8
    state_dim = 24
    action_dim = 8
    hidden_size = 32
    max_action = 1.0  # unused in forward (kept for parity with the module signature)

    params = init_td3_critic_params(k_params, state_dim, action_dim, hidden_size)

    inputs = jax.random.normal(k_state, (batch, state_dim), jnp.float32)
    actions = jax.random.normal(k_action, (batch, action_dim), jnp.float32)

    # ---- f32 path, single-tile grid (tight tolerance) ----
    packed_f32 = pack_td3_critic_params(params)            # f32 operands
    q1, q2 = td3_critic_forward(inputs, actions, packed_f32)
    jax.block_until_ready((q1, q2))
    q1_ref, q2_ref = td3_critic_reference(inputs, actions, params)
    assert q1.shape == (batch, 1) and q2.shape == (batch, 1)
    assert jnp.allclose(q1, q1_ref, atol=5e-5, rtol=5e-5)
    assert jnp.allclose(q2, q2_ref, atol=5e-5, rtol=5e-5)

    # ---- ragged batch, multi-step grid (boundary-block path, no pad) ----
    batch2 = 272
    k_s2, k_a2 = jax.random.split(jax.random.PRNGKey(1), 2)
    inputs2 = jax.random.normal(k_s2, (batch2, state_dim), jnp.float32)
    actions2 = jax.random.normal(k_a2, (batch2, action_dim), jnp.float32)
    q1b, q2b = td3_critic_forward(inputs2, actions2, packed_f32, block_b=128)
    jax.block_until_ready((q1b, q2b))
    q1b_ref, q2b_ref = td3_critic_reference(inputs2, actions2, params)
    assert q1b.shape == (batch2, 1) and q2b.shape == (batch2, 1)
    assert jnp.allclose(q1b, q1b_ref, atol=5e-5, rtol=5e-5)
    assert jnp.allclose(q2b, q2b_ref, atol=5e-5, rtol=5e-5)

    # ---- bf16 operand packing (v6e/v7x bandwidth path), loose tolerance ----
    packed_bf16 = pack_td3_critic_params(params, dtype=jnp.bfloat16)
    q1c, q2c = td3_critic_forward(inputs2, actions2, packed_bf16, block_b=128)
    jax.block_until_ready((q1c, q2c))
    assert jnp.allclose(q1c, q1b_ref, atol=1e-1, rtol=1e-2)
    assert jnp.allclose(q2c, q2b_ref, atol=1e-1, rtol=1e-2)

    print("KERNEL_OK")
</pallas_src>

<mosaic_0001>
module attributes {stable_mosaic.version = 11 : i64} {
  func.func @_td3_critic_kernel(%arg0: i32, %arg1: memref<8x24xf32, #tpu.memory_space<vmem>>, %arg2: memref<8x8xf32, #tpu.memory_space<vmem>>, %arg3: memref<32x64xf32, #tpu.memory_space<vmem>>, %arg4: memref<1x64xf32, #tpu.memory_space<vmem>>, %arg5: memref<64x2xf32, #tpu.memory_space<vmem>>, %arg6: memref<1x2xf32, #tpu.memory_space<vmem>>, %arg7: memref<8x2xf32, #tpu.memory_space<vmem>>) attributes {dimension_semantics = [#tpu.dimension_semantics<parallel>], iteration_bounds = array<i64: 1>, scalar_prefetch = 0 : i64, scratch_operands = 0 : i64, tpu.core_type = #tpu.core_type<tc>, window_params = [{transform_indices = @transform_0, window_bounds = array<i64: 8, 24>}, {transform_indices = @transform_1, window_bounds = array<i64: 8, 8>}, {pipeline_mode = #tpu.pipeline_mode<synchronous>, transform_indices = @transform_2, window_bounds = array<i64: 32, 64>}, {pipeline_mode = #tpu.pipeline_mode<synchronous>, transform_indices = @transform_3, window_bounds = array<i64: 1, 64>}, {pipeline_mode = #tpu.pipeline_mode<synchronous>, transform_indices = @transform_4, window_bounds = array<i64: 64, 2>}, {pipeline_mode = #tpu.pipeline_mode<synchronous>, transform_indices = @transform_5, window_bounds = array<i64: 1, 2>}, {transform_indices = @transform_6, window_bounds = array<i64: 8, 2>}]} {
    %c0 = arith.constant 0 : index
    %c0_0 = arith.constant 0 : index
    %0 = vector.load %arg1[%c0, %c0_0] : memref<8x24xf32, #tpu.memory_space<vmem>>, vector<8x24xf32>
    %c0_1 = arith.constant 0 : index
    %c0_2 = arith.constant 0 : index
    %1 = vector.load %arg2[%c0_1, %c0_2] : memref<8x8xf32, #tpu.memory_space<vmem>>, vector<8x8xf32>
    %2 = tpu.concatenate %0, %1 in 1 : vector<8x24xf32>, vector<8x8xf32> -> vector<8x32xf32>
    %c0_3 = arith.constant 0 : index
    %c0_4 = arith.constant 0 : index
    %3 = vector.load %arg3[%c0_3, %c0_4] : memref<32x64xf32, #tpu.memory_space<vmem>>, vector<32x64xf32>
    %cst = arith.constant dense<0.000000e+00> : vector<8x64xf32>
    %4 = tpu.matmul %2, %3, %cst {dimension_numbers = #tpu.dot_dimension_numbers<[1], [0], [0], [1], [0, 0, 1, 1], [], []>} : vector<8x32xf32>, vector<32x64xf32>, vector<8x64xf32> -> vector<8x64xf32>
    %c0_5 = arith.constant 0 : index
    %c0_6 = arith.constant 0 : index
    %5 = vector.load %arg4[%c0_5, %c0_6] : memref<1x64xf32, #tpu.memory_space<vmem>>, vector<1x64xf32>
    %6 = vector.broadcast %5 : vector<1x64xf32> to vector<8x64xf32>
    %7 = arith.addf %4, %6 : vector<8x64xf32>
    %cst_7 = arith.constant 0.000000e+00 : f32
    %8 = vector.broadcast %cst_7 : f32 to vector<8x64xf32>
    %9 = arith.maximumf %7, %8 : vector<8x64xf32>
    %c0_8 = arith.constant 0 : index
    %c0_9 = arith.constant 0 : index
    %10 = vector.load %arg5[%c0_8, %c0_9] : memref<64x2xf32, #tpu.memory_space<vmem>>, vector<64x2xf32>
    %cst_10 = arith.constant dense<0.000000e+00> : vector<8x2xf32>
    %11 = tpu.matmul %9, %10, %cst_10 {dimension_numbers = #tpu.dot_dimension_numbers<[1], [0], [0], [1], [0, 0, 1, 1], [], []>} : vector<8x64xf32>, vector<64x2xf32>, vector<8x2xf32> -> vector<8x2xf32>
    %c0_11 = arith.constant 0 : index
    %c0_12 = arith.constant 0 : index
    %12 = vector.load %arg6[%c0_11, %c0_12] : memref<1x2xf32, #tpu.memory_space<vmem>>, vector<1x2xf32>
    %13 = vector.broadcast %12 : vector<1x2xf32> to vector<8x2xf32>
    %14 = arith.addf %11, %13 : vector<8x2xf32>
    %c0_13 = arith.constant 0 : index
    %c0_14 = arith.constant 0 : index
    %15 = vector.load %arg7[%c0_13, %c0_14] : memref<8x2xf32, #tpu.memory_space<vmem>>, vector<8x2xf32>
    tpu.vector_store %arg7[%c0_13, %c0_14], %14 {strides = array<i32>} : memref<8x2xf32, #tpu.memory_space<vmem>>, vector<8x2xf32>,
    return
  }
  func.func @transform_0(%arg0: i32) -> (i32, i32) {
    %c0_i32 = arith.constant 0 : i32
    %c0_i32_0 = arith.constant 0 : i32
    return %arg0, %c0_i32 : i32, i32
  }
  func.func @transform_1(%arg0: i32) -> (i32, i32) {
    %c0_i32 = arith.constant 0 : i32
    %c0_i32_0 = arith.constant 0 : i32
    return %arg0, %c0_i32 : i32, i32
  }
  func.func @transform_2(%arg0: i32) -> (i32, i32) {
    %c0_i32 = arith.constant 0 : i32
    %c0_i32_0 = arith.constant 0 : i32
    %c0_i32_1 = arith.constant 0 : i32
    return %c0_i32, %c0_i32_0 : i32, i32
  }
  func.func @transform_3(%arg0: i32) -> (i32, i32) {
    %c0_i32 = arith.constant 0 : i32
    %c0_i32_0 = arith.constant 0 : i32
    %c0_i32_1 = arith.constant 0 : i32
    return %c0_i32, %c0_i32_0 : i32, i32
  }
  func.func @transform_4(%arg0: i32) -> (i32, i32) {
    %c0_i32 = arith.constant 0 : i32
    %c0_i32_0 = arith.constant 0 : i32
    %c0_i32_1 = arith.constant 0 : i32
    return %c0_i32, %c0_i32_0 : i32, i32
  }
  func.func @transform_5(%arg0: i32) -> (i32, i32) {
    %c0_i32 = arith.constant 0 : i32
    %c0_i32_0 = arith.constant 0 : i32
    %c0_i32_1 = arith.constant 0 : i32
    return %c0_i32, %c0_i32_0 : i32, i32
  }
  func.func @transform_6(%arg0: i32) -> (i32, i32) {
    %c0_i32 = arith.constant 0 : i32
    %c0_i32_0 = arith.constant 0 : i32
    return %arg0, %c0_i32 : i32, i32
  }
}

</mosaic_0001>

<llo_original>
// kernel: tpu_custom_call.1
$region0: #{tpu_custom_call.1}
  #allocation0 [shape = 'u32[]', space=smem, size = 0x4, offset = 0x4, fixed_abs, tag = 'smem constant byte address 0x4 - core index']
  #allocation1 [shape = 'u32[144,128]{1,0:T(1,128)}', space=vmem, size = 0x12000, scoped, tag = 'internal scratch']
  %s0 = inlined_call_operand.vmem [shape: f32[8,24], index: 0, kind: input, shape index: {}]
  %s1 = inlined_call_operand.vmem [shape: f32[8,8], index: 1, kind: input, shape index: {}]
  %s2 = inlined_call_operand.vmem [shape: f32[32,64], index: 2, kind: input, shape index: {}]
  %s3 = inlined_call_operand.vmem [shape: f32[1,64], index: 3, kind: input, shape index: {}]
  %s4 = inlined_call_operand.vmem [shape: f32[64,2], index: 4, kind: input, shape index: {}]
  %s5 = inlined_call_operand.vmem [shape: f32[1,2], index: 5, kind: input, shape index: {}]
  %s6 = inlined_call_operand.vmem [shape: f32[8,2], index: 6, kind: output, shape index: {}]
  %s7 = sld [smem:[#allocation0]]
  $region34: #{tpu_custom_call.1} parent=0
    _
  %s9 = ssub.s32 1, %s7
  %s10 = scalar_select 0, %s9, %s7
  // Predicated region
  $region2: #{tpu_custom_call.1} parent=0 // pred_check
    _
  $region3: #{tpu_custom_call.1} parent=0 // pred_check_branch
    %12 = sbr.rel (0) target = $region5
  $region4: #{tpu_custom_call.1} parent=0 // pred_region
    _
  $region5: #{tpu_custom_call.1} parent=0 // pred_fallthru
    _
  // Predicated region
  $region6: #{tpu_custom_call.1} parent=0 // pred_check
    _
  $region7: #{tpu_custom_call.1} parent=0 // pred_check_branch
    %14 = sbr.rel (0) target = $region9
  $region8: #{tpu_custom_call.1} parent=0 // pred_region
    _
  $region9: #{tpu_custom_call.1} parent=0 // pred_fallthru
    _
  // Predicated region
  $region10: #{tpu_custom_call.1} parent=0 // pred_check
    _
  $region11: #{tpu_custom_call.1} parent=0 // pred_check_branch
    %16 = sbr.rel (0) target = $region13
  $region12: #{tpu_custom_call.1} parent=0 // pred_region
    _
  $region13: #{tpu_custom_call.1} parent=0 // pred_fallthru
    _
  // Predicated region
  $region14: #{tpu_custom_call.1} parent=0 // pred_check
    _
  $region15: #{tpu_custom_call.1} parent=0 // pred_check_branch
    %18 = sbr.rel (0) target = $region17
  $region16: #{tpu_custom_call.1} parent=0 // pred_region
    _
  $region17: #{tpu_custom_call.1} parent=0 // pred_fallthru
    _
  // Predicated region
  $region18: #{tpu_custom_call.1} parent=0 // pred_check
    _
  $region19: #{tpu_custom_call.1} parent=0 // pred_check_branch
    %20 = sbr.rel (0) target = $region21
  $region20: #{tpu_custom_call.1} parent=0 // pred_region
    _
  $region21: #{tpu_custom_call.1} parent=0 // pred_fallthru
    _
  // Predicated region
  $region22: #{tpu_custom_call.1} parent=0 // pred_check
    _
  $region23: #{tpu_custom_call.1} parent=0 // pred_check_branch
    %22 = sbr.rel (0) target = $region25
  $region24: #{tpu_custom_call.1} parent=0 // pred_region
    _
  $region25: #{tpu_custom_call.1} parent=0 // pred_fallthru
    _
  %v23 = vld [vmem:[%s0] sm:$0xff]
  %v24 = vld [vmem:[%s1] sm:$0xff]
  %26 = vrot.lane.b32.xlu0 %v24, 24
  %v27 = vpop.permute.xlu0 %26
  %vm29 = vcmask 195584
  %v30 = vsel %vm29, %v23, %v27
  %v31 = vld [vmem:[%s2] sm:$0xff]
  %v32 = vld [vmem:[%s2 + $0x8] sm:$0xff]
  %v33 = vld [vmem:[%s2 + $0x10] sm:$0xff]
  %v34 = vld [vmem:[%s2 + $0x18] sm:$0xff]
  %v35 = vld [vmem:[%s3] sm:$0x1]
  %v37 = vlaneseq
  %v38 = vshrl.u32 %v37, 7
  %v39 = vsub.s32 0, %v38
  %v40 = vrot.slane %v35, %v39
  %vm42 = vcmask 261120
  %v44 = vsel %vm42, %v30, 0
  %46 = vmatprep.subr.mxu0 0.0
  %47 = vmatpush1.msra.mxu0 %v31
  %48 = vmatprep.subr.mxu0 0.0
  %49 = vmatpush1.msra.mxu0 %v32
  %50 = vmatprep.subr.mxu0 0.0
  %51 = vmatpush1.msra.mxu0 %v33
  %52 = vmatprep.subr.mxu0 0.0
  %53 = vmatpush1.msra.mxu0 %v34
  %54 = vmatprep.subr.mxu0 0.0
  %55 = vmatpush1.msra.mxu0 0.0
  %56 = vmatprep.subr.mxu0 0.0
  %57 = vmatpush1.msra.mxu0 0.0
  %58 = vmatprep.subr.mxu0 0.0
  %59 = vmatpush1.msra.mxu0 0.0
  %60 = vmatprep.subr.mxu0 0.0
  %61 = vmatpush1.msra.mxu0 0.0
  %62 = vmatprep.subr.mxu0 0.0
  %63 = vmatpush1.msra.mxu0 0.0
  %64 = vmatprep.subr.mxu0 0.0
  %65 = vmatpush1.msra.mxu0 0.0
  %66 = vmatprep.subr.mxu0 0.0
  %67 = vmatpush1.msra.mxu0 0.0
  %68 = vmatprep.subr.mxu0 0.0
  %69 = vmatpush1.msra.mxu0 0.0
  %70 = vmatprep.subr.mxu0 0.0
  %71 = vmatpush1.msra.mxu0 0.0
  %72 = vmatprep.subr.mxu0 0.0
  %73 = vmatpush1.msra.mxu0 0.0
  %74 = vmatprep.subr.mxu0 0.0
  %75 = vmatpush1.msra.mxu0 0.0
  %76 = vmatprep.subr.mxu0 0.0
  %77 = vmatpush1.msra.mxu0 0.0
  %78 = vmatprep.subr.mxu0 0.0
  %79 = vmatpush1.msra.mxu0 0.0
  %80 = vmatprep.subr.mxu0 0.0
  %81 = vmatpush1.msra.mxu0 0.0
  %82 = vmatprep.subr.mxu0 0.0
  %83 = vmatpush1.msra.mxu0 0.0
  %84 = vmatprep.subr.mxu0 0.0
  %85 = vmatpush1.msra.mxu0 0.0
  %86 = vmatprep.subr.mxu0 0.0
  %87 = vmatpush1.msra.mxu0 0.0
  %88 = vmatprep.subr.mxu0 0.0
  %89 = vmatpush1.msra.mxu0 0.0
  %90 = vmatprep.subr.mxu0 0.0
  %91 = vmatpush1.msra.mxu0 0.0
  %92 = vmatprep.subr.mxu0 0.0
  %93 = vmatpush1.msra.mxu0 0.0
  %94 = vmatprep.subr.mxu0 0.0
  %95 = vmatpush1.msra.mxu0 0.0
  %96 = vmatprep.subr.mxu0 0.0
  %97 = vmatpush1.msra.mxu0 0.0
  %98 = vmatprep.subr.mxu0 0.0
  %99 = vmatpush1.msra.mxu0 0.0
  %100 = vmatprep.subr.mxu0 0.0
  %101 = vmatpush1.msra.mxu0 0.0
  %102 = vmatprep.subr.mxu0 0.0
  %103 = vmatpush1.msra.mxu0 0.0
  %104 = vmatprep.subr.mxu0 0.0
  %105 = vmatpush1.msra.mxu0 0.0
  %106 = vmatprep.subr.mxu0 0.0
  %107 = vmatpush1.msra.mxu0 0.0
  %108 = vmatprep.subr.mxu0 0.0
  %109 = vmatpush1.msra.mxu0 0.0
  %110 = vmatprep.mubr.f32.mxu0 0.0
  %111 = vmatmul.mubr.f32.gmra.mrb[0].mxu0 %v44
  %v112 = vpop.f32.mrb[0].mxu0
  %v113 = vadd.f32 %v40, %v112
  %v114 = vpop.f32.mrb[0].mxu0
  %115 = vdwg.mxu0
  %v116 = vmax.f32 %v113, 0.0
  %v117 = vld [vmem:[%s4] sm:$0xff]
  %v118 = vld [vmem:[%s4 + $0x8] sm:$0xff]
  %v119 = vld [vmem:[%s4 + $0x10] sm:$0xff]
  %v120 = vld [vmem:[%s4 + $0x18] sm:$0xff]
  %v121 = vld [vmem:[%s4 + $0x20] sm:$0xff]
  %v122 = vld [vmem:[%s4 + $0x28] sm:$0xff]
  %v123 = vld [vmem:[%s4 + $0x30] sm:$0xff]
  %v124 = vld [vmem:[%s4 + $0x38] sm:$0xff]
  %v125 = vld [vmem:[%s5] sm:$0x1]
  %v127 = vlaneseq
  %v128 = vshrl.u32 %v127, 7
  %v129 = vsub.s32 0, %v128
  %v130 = vrot.slane %v125, %v129
  %vm132 = vcmask 523264
  %v134 = vsel %vm132, %v116, 0
  %136 = vmatprep.subr.mxu0 0.0
  %137 = vmatpush1.msra.mxu0 %v117
  %138 = vmatprep.subr.mxu0 0.0
  %139 = vmatpush1.msra.mxu0 %v118
  %140 = vmatprep.subr.mxu0 0.0
  %141 = vmatpush1.msra.mxu0 %v119
  %142 = vmatprep.subr.mxu0 0.0
  %143 = vmatpush1.msra.mxu0 %v120
  %144 = vmatprep.subr.mxu0 0.0
  %145 = vmatpush1.msra.mxu0 %v121
  %146 = vmatprep.subr.mxu0 0.0
  %147 = vmatpush1.msra.mxu0 %v122
  %148 = vmatprep.subr.mxu0 0.0
  %149 = vmatpush1.msra.mxu0 %v123
  %150 = vmatprep.subr.mxu0 0.0
  %151 = vmatpush1.msra.mxu0 %v124
  %152 = vmatprep.subr.mxu0 0.0
  %153 = vmatpush1.msra.mxu0 0.0
  %154 = vmatprep.subr.mxu0 0.0
  %155 = vmatpush1.msra.mxu0 0.0
  %156 = vmatprep.subr.mxu0 0.0
  %157 = vmatpush1.msra.mxu0 0.0
  %158 = vmatprep.subr.mxu0 0.0
  %159 = vmatpush1.msra.mxu0 0.0
  %160 = vmatprep.subr.mxu0 0.0
  %161 = vmatpush1.msra.mxu0 0.0
  %162 = vmatprep.subr.mxu0 0.0
  %163 = vmatpush1.msra.mxu0 0.0
  %164 = vmatprep.subr.mxu0 0.0
  %165 = vmatpush1.msra.mxu0 0.0
  %166 = vmatprep.subr.mxu0 0.0
  %167 = vmatpush1.msra.mxu0 0.0
  %168 = vmatprep.subr.mxu0 0.0
  %169 = vmatpush1.msra.mxu0 0.0
  %170 = vmatprep.subr.mxu0 0.0
  %171 = vmatpush1.msra.mxu0 0.0
  %172 = vmatprep.subr.mxu0 0.0
  %173 = vmatpush1.msra.mxu0 0.0
  %174 = vmatprep.subr.mxu0 0.0
  %175 = vmatpush1.msra.mxu0 0.0
  %176 = vmatprep.subr.mxu0 0.0
  %177 = vmatpush1.msra.mxu0 0.0
  %178 = vmatprep.subr.mxu0 0.0
  %179 = vmatpush1.msra.mxu0 0.0
  %180 = vmatprep.subr.mxu0 0.0
  %181 = vmatpush1.msra.mxu0 0.0
  %182 = vmatprep.subr.mxu0 0.0
  %183 = vmatpush1.msra.mxu0 0.0
  %184 = vmatprep.subr.mxu0 0.0
  %185 = vmatpush1.msra.mxu0 0.0
  %186 = vmatprep.subr.mxu0 0.0
  %187 = vmatpush1.msra.mxu0 0.0
  %188 = vmatprep.subr.mxu0 0.0
  %189 = vmatpush1.msra.mxu0 0.0
  %190 = vmatprep.subr.mxu0 0.0
  %191 = vmatpush1.msra.mxu0 0.0
  %192 = vmatprep.subr.mxu0 0.0
  %193 = vmatpush1.msra.mxu0 0.0
  %194 = vmatprep.subr.mxu0 0.0
  %195 = vmatpush1.msra.mxu0 0.0
  %196 = vmatprep.subr.mxu0 0.0
  %197 = vmatpush1.msra.mxu0 0.0
  %198 = vmatprep.subr.mxu0 0.0
  %199 = vmatpush1.msra.mxu0 0.0
  %200 = vmatprep.mubr.f32.mxu0 0.0
  %201 = vmatmul.mubr.f32.gmra.mrb[0].mxu0 %v134
  %v202 = vpop.f32.mrb[0].mxu0
  %v203 = vadd.f32 %v130, %v202
  %v204 = vpop.f32.mrb[0].mxu0
  %205 = vdwg.mxu0
  %vm206 = vcmask 15360
  %207 = vst.msk [vmem:[%s6] sm:$0xff] %vm206, %v203
  // Predicated region
  $region26: #{tpu_custom_call.1} parent=0 // pred_check
    _
  $region27: #{tpu_custom_call.1} parent=0 // pred_check_branch
    %209 = sbr.rel (0) target = $region29
  $region28: #{tpu_custom_call.1} parent=0 // pred_region
    _
  $region29: #{tpu_custom_call.1} parent=0 // pred_fallthru
    _
  // Predicated region
  $region30: #{tpu_custom_call.1} parent=0 // pred_check
    _
  $region31: #{tpu_custom_call.1} parent=0 // pred_check_branch
    %211 = sbr.rel (0) target = $region33
  $region32: #{tpu_custom_call.1} parent=0 // pred_region
    _
  $region33: #{tpu_custom_call.1} parent=0 // pred_fallthru
    _

</llo_original>
